<compile_context>
chip_gen: v6e
topology: v6e:2x2x1
jax: 0.10.0
libtpu: 0.0.40
codegen_flags: <defaults>
</compile_context>

<pallas_src>
import functools

import jax
import jax.numpy as jnp
from jax.experimental import pallas as pl
from jax.experimental.pallas import tpu as pltpu

EPS = 1e-5       # torch.nn.GroupNorm default
_LANE = 128


def _gn_kernel(x_ref, gamma_ref, beta_ref, a_ref, o_ref, *, pad_count):
    """Normalize one (B, Cb, HWp) block holding whole groups of B samples."""
    # ---- pass 1: per-channel sums -> per-channel copy of the group mean ----
    ch_sum = jnp.sum(x_ref[...].astype(jnp.float32), axis=-1)           # (B, Cb)
    a = a_ref[...]                                                       # (Cb, Cb), 1/(Cg*HW) baked in
    mean_c = jnp.dot(ch_sum, a, preferred_element_type=jnp.float32)     # (B, Cb)

    # ---- pass 2: centered sum of squares (two-pass variance; re-read ref,
    # never keep the upcast block live across the body) ----------------------
    d = x_ref[...].astype(jnp.float32) - mean_c[:, :, None]
    ch_css = jnp.sum(d * d, axis=-1)                                     # (B, Cb)
    if pad_count:
        # zero-padded lanes each contributed mean^2 to the centered sum.
        ch_css = ch_css - jnp.float32(pad_count) * (mean_c * mean_c)
    var_c = jnp.maximum(jnp.dot(ch_css, a, preferred_element_type=jnp.float32), 0.0)
    inv_c = jax.lax.rsqrt(var_c + EPS)                                   # (B, Cb)

    # ---- fold affine into per-channel scale / shift -------------------------
    gamma = gamma_ref[...].astype(jnp.float32)[None]                     # (1, Cb, 1)
    beta = beta_ref[...].astype(jnp.float32)[None]                       # (1, Cb, 1)
    scale = inv_c[:, :, None] * gamma                                    # (B, Cb, 1)
    shift = beta - mean_c[:, :, None] * scale                            # (B, Cb, 1)

    # ---- apply: 2 VPU ops per element (re-read ref; cast fused into store) --
    o_ref[...] = (x_ref[...].astype(jnp.float32) * scale + shift).astype(o_ref.dtype)


def _vmem_capacity_bytes():
    """Physical VMEM per TensorCore (generation-aware), with a safe fallback."""
    try:
        info = pltpu.get_tpu_info()
        cap = getattr(info, "vmem_capacity_bytes", None)
        if cap:
            return int(cap)
    except Exception:
        pass
    return 64 * 1024 * 1024  # conservative: v7x per-TensorCore VMEM


def _divisors_desc(n):
    return [d for d in range(n, 0, -1) if n % d == 0]


def _pick_tiling(n, c, num_groups, hw_pad, itemsize, budget_bytes):
    """Pick (batch chunk B, group chunk Gb) so one block fits the budget."""
    cg = c // num_groups
    per_group = cg * hw_pad * itemsize

    gb = None
    for g in _divisors_desc(num_groups):          # largest chunk first
        cb = g * cg
        if cb != c and cb % 8 != 0:               # (8,128) sublane rule
            continue
        if g * per_group <= budget_bytes:
            gb = g
            break
    if gb is None:
        # Even one legal group chunk exceeds the budget: take the smallest
        # legal chunk anyway and raise the vmem limit in the caller.
        # TODO(synk): add an HW-tiled ("arbitrary") reduction grid axis with
        # sum/sumsq scratch + separate apply pass for this case.
        for g in sorted(_divisors_desc(num_groups)):
            cb = g * cg
            if cb == c or cb % 8 == 0:
                gb = g
                break

    grid_g = num_groups // gb
    block_g_bytes = gb * per_group
    fitting = [d for d in _divisors_desc(n) if d * block_g_bytes <= budget_bytes]
    if not fitting:
        b = 1
    else:
        b = fitting[0]
        if (n // b) * grid_g < 2:
            # Prefer >=2 grid steps (2 TensorCores on v7x; pipeline needs >1
            # step for DMA overlap), but only if blocks stay >=4 MiB, below
            # which HBM utilization drops on every generation.
            for d in fitting:
                if (n // d) * grid_g >= 2 and d * block_g_bytes >= 4 * 1024 * 1024:
                    b = d
                    break
    return b, gb


def group_norm_8(x, gamma, beta, *, num_groups=8):
    """GroupNorm(num_groups, C) on NCHW input x with per-channel affine."""
    N, C, H, W = x.shape
    assert C % num_groups == 0, "num_channels must be divisible by num_groups"
    cg = C // num_groups
    HW = H * W
    itemsize = jnp.dtype(x.dtype).itemsize

    # Lane-dense last dim: zero-pad HW to a multiple of 128 (stats corrected
    # in-kernel; pad sliced off below).
    hw_pad = ((HW + _LANE - 1) // _LANE) * _LANE
    pad_count = hw_pad - HW

    xr = x.reshape(N, C, HW)
    if pad_count:
        xr = jnp.pad(xr, ((0, 0), (0, 0), (0, pad_count)))
    gr = gamma.reshape(C, 1)   # channel on sublanes -> (Cb, 1) blocks are legal
    br = beta.reshape(C, 1)

    # Generation-aware VMEM accounting: peak ~= 2x input block + 2x output
    # block + f32 temporaries (~1x for f32 inputs, ~2x for bf16).
    cap = _vmem_capacity_bytes()
    vmem_limit = min(cap * 3 // 4, 112 * 1024 * 1024)
    denom = 4 + max(1, 4 // itemsize)
    budget = min(vmem_limit // denom, 16 * 1024 * 1024)

    B, Gb = _pick_tiling(N, C, num_groups, hw_pad, itemsize, budget)
    Cb = Gb * cg
    grid = (N // B, num_groups // Gb)

    block_bytes = B * Cb * hw_pad * itemsize
    vmem_limit = max(vmem_limit, min(int(denom * block_bytes * 1.15), int(cap * 0.9)))

    # Fused group-averaging matrix: (ch_sum @ A)[b, c] = mean of channel c's
    # group, with 1/(Cg * HW_real) baked in (built once, resident in VMEM).
    row = jnp.arange(Cb)
    a_mat = jnp.where((row[:, None] // cg) == (row[None, :] // cg),
                      jnp.float32(1.0 / (cg * HW)), jnp.float32(0.0))

    out = pl.pallas_call(
        functools.partial(_gn_kernel, pad_count=pad_count),
        out_shape=jax.ShapeDtypeStruct(xr.shape, x.dtype),
        grid_spec=pltpu.PrefetchScalarGridSpec(
            num_scalar_prefetch=0,
            grid=grid,
            in_specs=[
                pl.BlockSpec((B, Cb, hw_pad), lambda i, g: (i, g, 0)),
                pl.BlockSpec((Cb, 1), lambda i, g: (g, 0)),
                pl.BlockSpec((Cb, 1), lambda i, g: (g, 0)),
                pl.BlockSpec((Cb, Cb), lambda i, g: (0, 0)),
            ],
            out_specs=pl.BlockSpec((B, Cb, hw_pad), lambda i, g: (i, g, 0)),
        ),
        compiler_params=pltpu.CompilerParams(
            dimension_semantics=("parallel", "parallel"),
            vmem_limit_bytes=int(vmem_limit),
        ),
        cost_estimate=pl.CostEstimate(
            flops=6 * N * C * HW,
            transcendentals=N * C,
            bytes_accessed=2 * N * C * HW * itemsize,
        ),
    )(xr, gr, br, a_mat)

    if pad_count:
        out = out[:, :, :HW]
    return out.reshape(N, C, H, W)


def _reference_group_norm(x, gamma, beta, num_groups=8, eps=EPS):
    N, C, H, W = x.shape
    xr = x.reshape(N, num_groups, -1).astype(jnp.float32)
    mean = xr.mean(axis=-1, keepdims=True)
    var = ((xr - mean) ** 2).mean(axis=-1, keepdims=True)
    xn = ((xr - mean) / jnp.sqrt(var + eps)).reshape(N, C, H, W)
    return xn * gamma[None, :, None, None] + beta[None, :, None, None]


if __name__ == "__main__":
    key = jax.random.PRNGKey(0)
    kx, kg, kb = jax.random.split(key, 3)

    N, C, H, W = 2, 16, 16, 16          # C must be a multiple of 8 groups
    x = jax.random.normal(kx, (N, C, H, W), dtype=jnp.float32)

    # Deterministic synthetic affine params (perturbed from the ones/zeros
    # PyTorch default to exercise the affine path).
    gamma = 1.0 + 0.1 * jax.random.normal(kg, (C,), dtype=jnp.float32)
    beta = 0.1 * jax.random.normal(kb, (C,), dtype=jnp.float32)

    y = group_norm_8(x, gamma, beta, num_groups=8)
    y = jax.block_until_ready(y)

    y_ref = _reference_group_norm(x, gamma, beta)
    assert jnp.allclose(y, y_ref, atol=1e-4, rtol=1e-4), "mismatch vs reference"

    print("KERNEL_OK")
</pallas_src>

<mosaic_0001>
module attributes {stable_mosaic.version = 11 : i64} {
  func.func @_gn_kernel(%arg0: i32, %arg1: i32, %arg2: memref<2x16x256xf32, #tpu.memory_space<vmem>>, %arg3: memref<16x1xf32, #tpu.memory_space<vmem>>, %arg4: memref<16x1xf32, #tpu.memory_space<vmem>>, %arg5: memref<16x16xf32, #tpu.memory_space<vmem>>, %arg6: memref<2x16x256xf32, #tpu.memory_space<vmem>>) attributes {dimension_semantics = [#tpu.dimension_semantics<parallel>, #tpu.dimension_semantics<parallel>], iteration_bounds = array<i64: 1, 1>, scalar_prefetch = 0 : i64, scratch_operands = 0 : i64, tpu.core_type = #tpu.core_type<tc>, window_params = [{transform_indices = @transform_0, window_bounds = array<i64: 2, 16, 256>}, {transform_indices = @transform_1, window_bounds = array<i64: 16, 1>}, {transform_indices = @transform_2, window_bounds = array<i64: 16, 1>}, {pipeline_mode = #tpu.pipeline_mode<synchronous>, transform_indices = @transform_3, window_bounds = array<i64: 16, 16>}, {transform_indices = @transform_4, window_bounds = array<i64: 2, 16, 256>}]} {
    %c0 = arith.constant 0 : index
    %c0_0 = arith.constant 0 : index
    %c0_1 = arith.constant 0 : index
    %0 = vector.load %arg2[%c0, %c0_0, %c0_1] : memref<2x16x256xf32, #tpu.memory_space<vmem>>, vector<2x16x256xf32>
    %cst = arith.constant dense<0.000000e+00> : vector<2x16xf32>
    %1 = vector.multi_reduction <add>, %0, %cst [2] : vector<2x16x256xf32> to vector<2x16xf32>
    %c0_2 = arith.constant 0 : index
    %c0_3 = arith.constant 0 : index
    %2 = vector.load %arg5[%c0_2, %c0_3] : memref<16x16xf32, #tpu.memory_space<vmem>>, vector<16x16xf32>
    %cst_4 = arith.constant dense<0.000000e+00> : vector<2x16xf32>
    %3 = tpu.matmul %1, %2, %cst_4 {dimension_numbers = #tpu.dot_dimension_numbers<[1], [0], [0], [1], [0, 0, 1, 1], [], []>} : vector<2x16xf32>, vector<16x16xf32>, vector<2x16xf32> -> vector<2x16xf32>
    %c0_5 = arith.constant 0 : index
    %c0_6 = arith.constant 0 : index
    %c0_7 = arith.constant 0 : index
    %4 = vector.load %arg2[%c0_5, %c0_6, %c0_7] : memref<2x16x256xf32, #tpu.memory_space<vmem>>, vector<2x16x256xf32>
    %5 = vector.shape_cast %3 : vector<2x16xf32> to vector<2x16x1xf32>
    %6 = vector.broadcast %5 : vector<2x16x1xf32> to vector<2x16x256xf32>
    %7 = arith.subf %4, %6 : vector<2x16x256xf32>
    %8 = arith.mulf %7, %7 : vector<2x16x256xf32>
    %cst_8 = arith.constant dense<0.000000e+00> : vector<2x16xf32>
    %9 = vector.multi_reduction <add>, %8, %cst_8 [2] : vector<2x16x256xf32> to vector<2x16xf32>
    %cst_9 = arith.constant dense<0.000000e+00> : vector<2x16xf32>
    %10 = tpu.matmul %9, %2, %cst_9 {dimension_numbers = #tpu.dot_dimension_numbers<[1], [0], [0], [1], [0, 0, 1, 1], [], []>} : vector<2x16xf32>, vector<16x16xf32>, vector<2x16xf32> -> vector<2x16xf32>
    %cst_10 = arith.constant 0.000000e+00 : f32
    %11 = vector.broadcast %cst_10 : f32 to vector<2x16xf32>
    %12 = arith.maximumf %10, %11 : vector<2x16xf32>
    %cst_11 = arith.constant 9.99999974E-6 : f32
    %13 = vector.broadcast %cst_11 : f32 to vector<2x16xf32>
    %14 = arith.addf %12, %13 : vector<2x16xf32>
    %15 = math.rsqrt %14 : vector<2x16xf32>
    %c0_12 = arith.constant 0 : index
    %c0_13 = arith.constant 0 : index
    %16 = vector.load %arg3[%c0_12, %c0_13] : memref<16x1xf32, #tpu.memory_space<vmem>>, vector<16x1xf32>
    %17 = vector.shape_cast %16 : vector<16x1xf32> to vector<1x16x1xf32>
    %c0_14 = arith.constant 0 : index
    %c0_15 = arith.constant 0 : index
    %18 = vector.load %arg4[%c0_14, %c0_15] : memref<16x1xf32, #tpu.memory_space<vmem>>, vector<16x1xf32>
    %19 = vector.shape_cast %18 : vector<16x1xf32> to vector<1x16x1xf32>
    %20 = vector.shape_cast %15 : vector<2x16xf32> to vector<2x16x1xf32>
    %21 = vector.broadcast %17 : vector<1x16x1xf32> to vector<2x16x1xf32>
    %22 = arith.mulf %20, %21 : vector<2x16x1xf32>
    %23 = vector.shape_cast %3 : vector<2x16xf32> to vector<2x16x1xf32>
    %24 = arith.mulf %23, %22 : vector<2x16x1xf32>
    %25 = vector.broadcast %19 : vector<1x16x1xf32> to vector<2x16x1xf32>
    %26 = arith.subf %25, %24 : vector<2x16x1xf32>
    %c0_16 = arith.constant 0 : index
    %c0_17 = arith.constant 0 : index
    %c0_18 = arith.constant 0 : index
    %27 = vector.load %arg2[%c0_16, %c0_17, %c0_18] : memref<2x16x256xf32, #tpu.memory_space<vmem>>, vector<2x16x256xf32>
    %28 = vector.broadcast %22 : vector<2x16x1xf32> to vector<2x16x256xf32>
    %29 = arith.mulf %27, %28 : vector<2x16x256xf32>
    %30 = vector.broadcast %26 : vector<2x16x1xf32> to vector<2x16x256xf32>
    %31 = arith.addf %29, %30 : vector<2x16x256xf32>
    %c0_19 = arith.constant 0 : index
    %c0_20 = arith.constant 0 : index
    %c0_21 = arith.constant 0 : index
    %32 = vector.load %arg6[%c0_19, %c0_20, %c0_21] : memref<2x16x256xf32, #tpu.memory_space<vmem>>, vector<2x16x256xf32>
    tpu.vector_store %arg6[%c0_19, %c0_20, %c0_21], %31 {strides = array<i32>} : memref<2x16x256xf32, #tpu.memory_space<vmem>>, vector<2x16x256xf32>,
    return
  }
  func.func @transform_0(%arg0: i32, %arg1: i32) -> (i32, i32, i32) {
    %c0_i32 = arith.constant 0 : i32
    %c0_i32_0 = arith.constant 0 : i32
    return %arg0, %arg1, %c0_i32 : i32, i32, i32
  }
  func.func @transform_1(%arg0: i32, %arg1: i32) -> (i32, i32) {
    %c0_i32 = arith.constant 0 : i32
    %c0_i32_0 = arith.constant 0 : i32
    return %arg1, %c0_i32 : i32, i32
  }
  func.func @transform_2(%arg0: i32, %arg1: i32) -> (i32, i32) {
    %c0_i32 = arith.constant 0 : i32
    %c0_i32_0 = arith.constant 0 : i32
    return %arg1, %c0_i32 : i32, i32
  }
  func.func @transform_3(%arg0: i32, %arg1: i32) -> (i32, i32) {
    %c0_i32 = arith.constant 0 : i32
    %c0_i32_0 = arith.constant 0 : i32
    %c0_i32_1 = arith.constant 0 : i32
    return %c0_i32, %c0_i32_0 : i32, i32
  }
  func.func @transform_4(%arg0: i32, %arg1: i32) -> (i32, i32, i32) {
    %c0_i32 = arith.constant 0 : i32
    %c0_i32_0 = arith.constant 0 : i32
    return %arg0, %arg1, %c0_i32 : i32, i32, i32
  }
}

</mosaic_0001>

<llo_original>
// kernel: tpu_custom_call.1
$region0: #{tpu_custom_call.1}
  #allocation0 [shape = 'u32[]', space=smem, size = 0x4, offset = 0x4, fixed_abs, tag = 'smem constant byte address 0x4 - core index']
  #allocation1 [shape = 'u32[144,128]{1,0:T(1,128)}', space=vmem, size = 0x12000, scoped, tag = 'internal scratch']
  %s0 = inlined_call_operand.hbm [shape: f32[2,16,256], index: 0, kind: input, shape index: {}]
  %s1 = inlined_call_operand.vmem [shape: f32[16,1], index: 1, kind: input, shape index: {}]
  %s2 = inlined_call_operand.vmem [shape: f32[16,1], index: 2, kind: input, shape index: {}]
  %s3 = inlined_call_operand.vmem [shape: f32[16,16], index: 3, kind: input, shape index: {}]
  %s4 = inlined_call_operand.hbm [shape: f32[2,16,256], index: 4, kind: output, shape index: {}]
  %s5 = sld [smem:[#allocation0]]
  $region30: #{tpu_custom_call.1} parent=0
    _
  %s7 = ssub.s32 1, %s5
  %s8 = scalar_select 0, %s7, %s5
  $region1: #{tpu_custom_call.1} parent=0
    #allocation2 [shape = 'u8[32768]{0}', space=vmem, size = 0x8000, scoped, tag = 'input window, operand 0, single buffered']
    #allocation3 [shape = 's32[1]{0}', space=sflag, size = 0x4, scoped, tag = 'scoped memory for tpu_custom_call.1']
    #allocation4 [shape = 's32[1]{0}', space=sflag, size = 0x4, scoped, tag = 'scoped memory for tpu_custom_call.1']
    #allocation5 [shape = 'u8[32768]{0}', space=vmem, size = 0x8000, scoped, tag = 'output window, operand 0, single buffered']
    %9 = vsyncpa [#allocation3], 0
    %10 = vsyncpa [#allocation4], 0
    // Predicated region
    $region2: #{tpu_custom_call.1} parent=1 // pred_check
      _
    $region3: #{tpu_custom_call.1} parent=1 // pred_check_branch
      %12 = sbr.rel (0) target = $region5
    $region4: #{tpu_custom_call.1} parent=1 // pred_region
      %s14 = ssub.s32 1024, 1024
      %15 = vsyncadd [#allocation3], %s14
      %s16 = sshll.u32 [#allocation2], 4
      %s17 = int_to_ptr.vmem [resolvable:$true] %s16
      %22 = dma.hbm_to_vmem [thread:$0]  %s0, 1024, %s17, [#allocation3], 256, 256, 16
    $region5: #{tpu_custom_call.1} parent=1 // pred_fallthru
      _
    // Predicated region
    $region6: #{tpu_custom_call.1} parent=1 // pred_check
      _
    $region7: #{tpu_custom_call.1} parent=1 // pred_check_branch
      %24 = sbr.rel (0) target = $region9
    $region8: #{tpu_custom_call.1} parent=1 // pred_region
      _
    $region9: #{tpu_custom_call.1} parent=1 // pred_fallthru
      _
    // Predicated region
    $region10: #{tpu_custom_call.1} parent=1 // pred_check
      _
    $region11: #{tpu_custom_call.1} parent=1 // pred_check_branch
      %26 = sbr.rel (0) target = $region13
    $region12: #{tpu_custom_call.1} parent=1 // pred_region
      _
    $region13: #{tpu_custom_call.1} parent=1 // pred_fallthru
      _
    // Predicated region
    $region14: #{tpu_custom_call.1} parent=1 // pred_check
      _
    $region15: #{tpu_custom_call.1} parent=1 // pred_check_branch
      %28 = sbr.rel (0) target = $region17
    $region16: #{tpu_custom_call.1} parent=1 // pred_region
      _
    $region17: #{tpu_custom_call.1} parent=1 // pred_fallthru
      _
    // Predicated region
    $region18: #{tpu_custom_call.1} parent=1 // pred_check
      _
    $region19: #{tpu_custom_call.1} parent=1 // pred_check_branch
      %30 = sbr.rel (0) target = $region21
    $region20: #{tpu_custom_call.1} parent=1 // pred_region
      %31 = dma.done [#allocation3], 1024
    $region21: #{tpu_custom_call.1} parent=1 // pred_fallthru
      _
    %v32 = vld [vmem:[#allocation2] sm:$0xff]
    %v33 = vld [vmem:[#allocation2 + $0x8] sm:$0xff]
    %v34 = vld [vmem:[#allocation2 + $0x10] sm:$0xff]
    %v35 = vld [vmem:[#allocation2 + $0x18] sm:$0xff]
    %v36 = vld [vmem:[#allocation2 + $0x20] sm:$0xff]
    %v37 = vld [vmem:[#allocation2 + $0x28] sm:$0xff]
    %v38 = vld [vmem:[#allocation2 + $0x30] sm:$0xff]
    %v39 = vld [vmem:[#allocation2 + $0x38] sm:$0xff]
    %v40 = vadd.f32 %v32, %v33
    %41 = vadd.xlane.f32.xlu0 %v40
    %v42 = vpop.xlane.xlu0 %41
    %v43 = vadd.f32 %v34, %v35
    %44 = vadd.xlane.f32.xlu0 %v43
    %v45 = vpop.xlane.xlu0 %44
    %v46 = vadd.f32 %v36, %v37
    %47 = vadd.xlane.f32.xlu0 %v46
    %v48 = vpop.xlane.xlu0 %47
    %v49 = vadd.f32 %v38, %v39
    %50 = vadd.xlane.f32.xlu0 %v49
    %v51 = vpop.xlane.xlu0 %50
    %v52 = vld [vmem:[%s3] sm:$0xff]
    %v53 = vld [vmem:[%s3 + $0x8] sm:$0xff]
    %v58 = vlaneseq
    %v59 = vand.u32 %v58, 127
    %v60 = vlaneseq
    %v61 = vshrl.u32 %v60, 7
    %v62 = vsub.s32 %v59, %v61
    %v63 = vrot.slane %v42, %v62
    %v64 = vadd.s32 %v59, 4294967288
    %v65 = vlaneseq
    %v66 = vshrl.u32 %v65, 7
    %v67 = vsub.s32 %v64, %v66
    %v68 = vrot.slane %v45, %v67
    %vm69 = vcmask 130112
    %v70 = vsel %vm69, %v68, %v63
    %v71 = vlaneseq
    %v72 = vshrl.u32 %v71, 7
    %v73 = vsub.s32 %v59, %v72
    %v74 = vrot.slane %v48, %v73
    %v75 = vlaneseq
    %v76 = vshrl.u32 %v75, 7
    %v77 = vsub.s32 %v64, %v76
    %v78 = vrot.slane %v51, %v77
    %v79 = vsel %vm69, %v78, %v74
    %vm80 = vcmask 1041409
    %v81 = vsel %vm80, %v79, %v70
    %vm82 = vcmask 130048
    %v83 = vsel %vm82, %v81, 0
    %85 = vmatprep.subr.mxu0 0.0
    %86 = vmatpush1.msra.mxu0 0.0
    %87 = vmatprep.subr.mxu0 0.0
    %88 = vmatpush1.msra.mxu0 0.0
    %89 = vmatprep.subr.mxu0 0.0
    %90 = vmatpush1.msra.mxu0 0.0
    %91 = vmatprep.subr.mxu0 0.0
    %92 = vmatpush1.msra.mxu0 0.0
    %93 = vmatprep.subr.mxu0 0.0
    %94 = vmatpush1.msra.mxu0 0.0
    %95 = vmatprep.subr.mxu0 0.0
    %96 = vmatpush1.msra.mxu0 0.0
    %97 = vmatprep.subr.mxu0 0.0
    %98 = vmatpush1.msra.mxu0 0.0
    %99 = vmatprep.subr.mxu0 0.0
    %100 = vmatpush1.msra.mxu0 0.0
    %101 = vmatprep.subr.mxu0 0.0
    %102 = vmatpush1.msra.mxu0 0.0
    %103 = vmatprep.subr.mxu0 0.0
    %104 = vmatpush1.msra.mxu0 0.0
    %105 = vmatprep.subr.mxu0 0.0
    %106 = vmatpush1.msra.mxu0 0.0
    %107 = vmatprep.subr.mxu0 0.0
    %108 = vmatpush1.msra.mxu0 0.0
    %109 = vmatprep.subr.mxu0 0.0
    %110 = vmatpush1.msra.mxu0 0.0
    %111 = vmatprep.subr.mxu0 0.0
    %112 = vmatpush1.msra.mxu0 0.0
    %113 = vmatprep.subr.mxu0 0.0
    %114 = vmatpush1.msra.mxu0 %v53
    %115 = vmatprep.subr.mxu0 0.0
    %116 = vmatpush1.msra.mxu0 %v52
    %117 = vmatprep.subr.mxu0 0.0
    %118 = vmatpush2.msra.mxu0 0.0
    %119 = vmatprep.subr.mxu0 0.0
    %120 = vmatpush2.msra.mxu0 0.0
    %121 = vmatprep.subr.mxu0 0.0
    %122 = vmatpush2.msra.mxu0 0.0
    %123 = vmatprep.subr.mxu0 0.0
    %124 = vmatpush2.msra.mxu0 0.0
    %125 = vmatprep.subr.mxu0 0.0
    %126 = vmatpush2.msra.mxu0 0.0
    %127 = vmatprep.subr.mxu0 0.0
    %128 = vmatpush2.msra.mxu0 0.0
    %129 = vmatprep.subr.mxu0 0.0
    %130 = vmatpush2.msra.mxu0 0.0
    %131 = vmatprep.subr.mxu0 0.0
    %132 = vmatpush2.msra.mxu0 0.0
    %133 = vmatprep.subr.mxu0 0.0
    %134 = vmatpush2.msra.mxu0 0.0
    %135 = vmatprep.subr.mxu0 0.0
    %136 = vmatpush2.msra.mxu0 0.0
    %137 = vmatprep.subr.mxu0 0.0
    %138 = vmatpush2.msra.mxu0 0.0
    %139 = vmatprep.subr.mxu0 0.0
    %140 = vmatpush2.msra.mxu0 0.0
    %141 = vmatprep.subr.mxu0 0.0
    %142 = vmatpush2.msra.mxu0 0.0
    %143 = vmatprep.subr.mxu0 0.0
    %144 = vmatpush2.msra.mxu0 0.0
    %145 = vmatprep.subr.mxu0 0.0
    %146 = vmatpush2.msra.mxu0 0.0
    %147 = vmatprep.subr.mxu0 0.0
    %148 = vmatpush2.msra.mxu0 0.0
    %149 = vmatprep.mubr.f32.mxu0 0.0
    %150 = vmatmul.mubr.f32.gmra.mxu0 %v83
    %v151 = vpop.f32.mrf.mxu0
    %v152 = vadd.f32 0.0, %v151
    %v153 = vpop.f32.mrf.mxu0
    %154 = vdwg.mxu0
    %v155 = vlaneseq
    %v156 = vshrl.u32 %v155, 7
    %v157 = vsub.s32 0, %v156
    %v158 = vrot.slane %v152, %v157
    %160 = vbcast.lane.b32.xlu0 %v158, 256
    %v161 = vpop.permute.xlu0 %160
    %s163 = sor.u32 256, 8
    %164 = vbcast.lane.b32.xlu0 %v158, %s163
    %v165 = vpop.permute.xlu0 %164
    %v166 = vlaneseq
    %v167 = vshrl.u32 %v166, 7
    %v168 = vsub.s32 1, %v167
    %v169 = vrot.slane %v152, %v168
    %171 = vbcast.lane.b32.xlu0 %v169, 256
    %v172 = vpop.permute.xlu0 %171
    %s174 = sor.u32 256, 8
    %175 = vbcast.lane.b32.xlu0 %v169, %s174
    %v176 = vpop.permute.xlu0 %175
    %v177 = vsub.f32 %v32, %v161
    %v178 = vsub.f32 %v33, %v161
    %v179 = vsub.f32 %v34, %v165
    %v180 = vsub.f32 %v35, %v165
    %v181 = vsub.f32 %v36, %v172
    %v182 = vsub.f32 %v37, %v172
    %v183 = vsub.f32 %v38, %v176
    %v184 = vsub.f32 %v39, %v176
    %v185 = vmul.f32 %v177, %v177
    %v186 = vmul.f32 %v178, %v178
    %v187 = vmul.f32 %v179, %v179
    %v188 = vmul.f32 %v180, %v180
    %v189 = vmul.f32 %v181, %v181
    %v190 = vmul.f32 %v182, %v182
    %v191 = vmul.f32 %v183, %v183
    %v192 = vmul.f32 %v184, %v184
    %v193 = vadd.f32 %v185, %v186
    %194 = vadd.xlane.f32.xlu0 %v193
    %v195 = vpop.xlane.xlu0 %194
    %v196 = vadd.f32 %v187, %v188
    %197 = vadd.xlane.f32.xlu0 %v196
    %v198 = vpop.xlane.xlu0 %197
    %v199 = vadd.f32 %v189, %v190
    %200 = vadd.xlane.f32.xlu0 %v199
    %v201 = vpop.xlane.xlu0 %200
    %v202 = vadd.f32 %v191, %v192
    %203 = vadd.xlane.f32.xlu0 %v202
    %v204 = vpop.xlane.xlu0 %203
    %v209 = vlaneseq
    %v210 = vshrl.u32 %v209, 7
    %v211 = vsub.s32 %v59, %v210
    %v212 = vrot.slane %v195, %v211
    %v213 = vlaneseq
    %v214 = vshrl.u32 %v213, 7
    %v215 = vsub.s32 %v64, %v214
    %v216 = vrot.slane %v198, %v215
    %v217 = vsel %vm69, %v216, %v212
    %v218 = vlaneseq
    %v219 = vshrl.u32 %v218, 7
    %v220 = vsub.s32 %v59, %v219
    %v221 = vrot.slane %v201, %v220
    %v222 = vlaneseq
    %v223 = vshrl.u32 %v222, 7
    %v224 = vsub.s32 %v64, %v223
    %v225 = vrot.slane %v204, %v224
    %v226 = vsel %vm69, %v225, %v221
    %v227 = vsel %vm80, %v226, %v217
    %v228 = vsel %vm82, %v227, 0
    %230 = vmatprep.subr.mxu0 0.0
    %231 = vmatpush1.msra.mxu0 0.0
    %232 = vmatprep.subr.mxu0 0.0
    %233 = vmatpush1.msra.mxu0 0.0
    %234 = vmatprep.subr.mxu0 0.0
    %235 = vmatpush1.msra.mxu0 0.0
    %236 = vmatprep.subr.mxu0 0.0
    %237 = vmatpush1.msra.mxu0 0.0
    %238 = vmatprep.subr.mxu0 0.0
    %239 = vmatpush1.msra.mxu0 0.0
    %240 = vmatprep.subr.mxu0 0.0
    %241 = vmatpush1.msra.mxu0 0.0
    %242 = vmatprep.subr.mxu0 0.0
    %243 = vmatpush1.msra.mxu0 0.0
    %244 = vmatprep.subr.mxu0 0.0
    %245 = vmatpush1.msra.mxu0 0.0
    %246 = vmatprep.subr.mxu0 0.0
    %247 = vmatpush1.msra.mxu0 0.0
    %248 = vmatprep.subr.mxu0 0.0
    %249 = vmatpush1.msra.mxu0 0.0
    %250 = vmatprep.subr.mxu0 0.0
    %251 = vmatpush1.msra.mxu0 0.0
    %252 = vmatprep.subr.mxu0 0.0
    %253 = vmatpush1.msra.mxu0 0.0
    %254 = vmatprep.subr.mxu0 0.0
    %255 = vmatpush1.msra.mxu0 0.0
    %256 = vmatprep.subr.mxu0 0.0
    %257 = vmatpush1.msra.mxu0 0.0
    %258 = vmatprep.subr.mxu0 0.0
    %259 = vmatpush1.msra.mxu0 %v53
    %260 = vmatprep.subr.mxu0 0.0
    %261 = vmatpush1.msra.mxu0 %v52
    %262 = vmatprep.subr.mxu0 0.0
    %263 = vmatpush2.msra.mxu0 0.0
    %264 = vmatprep.subr.mxu0 0.0
    %265 = vmatpush2.msra.mxu0 0.0
    %266 = vmatprep.subr.mxu0 0.0
    %267 = vmatpush2.msra.mxu0 0.0
    %268 = vmatprep.subr.mxu0 0.0
    %269 = vmatpush2.msra.mxu0 0.0
    %270 = vmatprep.subr.mxu0 0.0
    %271 = vmatpush2.msra.mxu0 0.0
    %272 = vmatprep.subr.mxu0 0.0
    %273 = vmatpush2.msra.mxu0 0.0
    %274 = vmatprep.subr.mxu0 0.0
    %275 = vmatpush2.msra.mxu0 0.0
    %276 = vmatprep.subr.mxu0 0.0
    %277 = vmatpush2.msra.mxu0 0.0
    %278 = vmatprep.subr.mxu0 0.0
    %279 = vmatpush2.msra.mxu0 0.0
    %280 = vmatprep.subr.mxu0 0.0
    %281 = vmatpush2.msra.mxu0 0.0
    %282 = vmatprep.subr.mxu0 0.0
    %283 = vmatpush2.msra.mxu0 0.0
    %284 = vmatprep.subr.mxu0 0.0
    %285 = vmatpush2.msra.mxu0 0.0
    %286 = vmatprep.subr.mxu0 0.0
    %287 = vmatpush2.msra.mxu0 0.0
    %288 = vmatprep.subr.mxu0 0.0
    %289 = vmatpush2.msra.mxu0 0.0
    %290 = vmatprep.subr.mxu0 0.0
    %291 = vmatpush2.msra.mxu0 0.0
    %292 = vmatprep.subr.mxu0 0.0
    %293 = vmatpush2.msra.mxu0 0.0
    %294 = vmatprep.mubr.f32.mxu0 0.0
    %295 = vmatmul.mubr.f32.gmra.mxu0 %v228
    %v296 = vpop.f32.mrf.mxu0
    %v297 = vadd.f32 0.0, %v296
    %v298 = vpop.f32.mrf.mxu0
    %299 = vdwg.mxu0
    %v300 = vmax.f32 %v297, 0.0
    %v301 = vadd.f32 %v300, 1e-05
    %v302 = vrsqrt.pop %v301
    %v303 = vld [vmem:[%s1] sm:$0xff]
    %v304 = vld [vmem:[%s1 + $0x8] sm:$0xff]
    %v305 = vld [vmem:[%s2] sm:$0xff]
    %v306 = vld [vmem:[%s2 + $0x8] sm:$0xff]
    %v307 = vlaneseq
    %v308 = vshrl.u32 %v307, 7
    %v309 = vsub.s32 0, %v308
    %v310 = vrot.slane %v302, %v309
    %312 = vbcast.lane.b32.xlu0 %v310, 256
    %v313 = vpop.permute.xlu0 %312
    %s315 = sor.u32 256, 8
    %316 = vbcast.lane.b32.xlu0 %v310, %s315
    %v317 = vpop.permute.xlu0 %316
    %v318 = vlaneseq
    %v319 = vshrl.u32 %v318, 7
    %v320 = vsub.s32 1, %v319
    %v321 = vrot.slane %v302, %v320
    %323 = vbcast.lane.b32.xlu0 %v321, 256
    %v324 = vpop.permute.xlu0 %323
    %s326 = sor.u32 256, 8
    %327 = vbcast.lane.b32.xlu0 %v321, %s326
    %v328 = vpop.permute.xlu0 %327
    %v329 = vmul.f32 %v313, %v303
    %v330 = vmul.f32 %v317, %v304
    %v331 = vmul.f32 %v324, %v303
    %v332 = vmul.f32 %v328, %v304
    %v333 = vmul.f32 %v161, %v329
    %v334 = vmul.f32 %v165, %v330
    %v335 = vmul.f32 %v172, %v331
    %v336 = vmul.f32 %v176, %v332
    %v337 = vsub.f32 %v305, %v333
    %v338 = vsub.f32 %v306, %v334
    %v339 = vsub.f32 %v305, %v335
    %v340 = vsub.f32 %v306, %v336
    %342 = vset.pattern.permute.xlu0 0
    %343 = vperm.xlu0 %342, %v329
    %v344 = vpop.permute.xlu0 %343
    %347 = vset.pattern.permute.xlu0 0
    %348 = vperm.xlu0 %347, %v330
    %v349 = vpop.permute.xlu0 %348
    %352 = vset.pattern.permute.xlu0 0
    %353 = vperm.xlu0 %352, %v331
    %v354 = vpop.permute.xlu0 %353
    %357 = vset.pattern.permute.xlu0 0
    %358 = vperm.xlu0 %357, %v332
    %v359 = vpop.permute.xlu0 %358
    %v361 = vmul.f32 %v32, %v344
    %v362 = vmul.f32 %v33, %v344
    %v363 = vmul.f32 %v34, %v349
    %v364 = vmul.f32 %v35, %v349
    %v365 = vmul.f32 %v36, %v354
    %v366 = vmul.f32 %v37, %v354
    %v367 = vmul.f32 %v38, %v359
    %v368 = vmul.f32 %v39, %v359
    %370 = vset.pattern.permute.xlu0 0
    %371 = vperm.xlu0 %370, %v337
    %v372 = vpop.permute.xlu0 %371
    %375 = vset.pattern.permute.xlu0 0
    %376 = vperm.xlu0 %375, %v338
    %v377 = vpop.permute.xlu0 %376
    %380 = vset.pattern.permute.xlu0 0
    %381 = vperm.xlu0 %380, %v339
    %v382 = vpop.permute.xlu0 %381
    %385 = vset.pattern.permute.xlu0 0
    %386 = vperm.xlu0 %385, %v340
    %v387 = vpop.permute.xlu0 %386
    %v389 = vadd.f32 %v361, %v372
    %v390 = vadd.f32 %v362, %v372
    %v391 = vadd.f32 %v363, %v377
    %v392 = vadd.f32 %v364, %v377
    %v393 = vadd.f32 %v365, %v382
    %v394 = vadd.f32 %v366, %v382
    %v395 = vadd.f32 %v367, %v387
    %v396 = vadd.f32 %v368, %v387
    %397 = vst [vmem:[#allocation5] sm:$0xff] %v389
    %398 = vst [vmem:[#allocation5 + $0x8] sm:$0xff] %v390
    %399 = vst [vmem:[#allocation5 + $0x10] sm:$0xff] %v391
    %400 = vst [vmem:[#allocation5 + $0x18] sm:$0xff] %v392
    %401 = vst [vmem:[#allocation5 + $0x20] sm:$0xff] %v393
    %402 = vst [vmem:[#allocation5 + $0x28] sm:$0xff] %v394
    %403 = vst [vmem:[#allocation5 + $0x30] sm:$0xff] %v395
    %404 = vst [vmem:[#allocation5 + $0x38] sm:$0xff] %v396
    // Predicated region
    $region22: #{tpu_custom_call.1} parent=1 // pred_check
      _
    $region23: #{tpu_custom_call.1} parent=1 // pred_check_branch
      %406 = sbr.rel (0) target = $region25
    $region24: #{tpu_custom_call.1} parent=1 // pred_region
      %s408 = ssub.s32 1024, 1024
      %409 = vsyncadd [#allocation4], %s408
      %s410 = sshll.u32 [#allocation5], 4
      %s411 = int_to_ptr.vmem [resolvable:$true] %s410
      %416 = dma.vmem_to_hbm [thread:$0]  %s411, 1024, %s4, [#allocation4], 256, 256, 16
    $region25: #{tpu_custom_call.1} parent=1 // pred_fallthru
      _
    // Predicated region
    $region26: #{tpu_custom_call.1} parent=1 // pred_check
      _
    $region27: #{tpu_custom_call.1} parent=1 // pred_check_branch
      %418 = sbr.rel (0) target = $region29
    $region28: #{tpu_custom_call.1} parent=1 // pred_region
      %419 = dma.done [#allocation4], 1024
    $region29: #{tpu_custom_call.1} parent=1 // pred_fallthru
      _
    %420 = vsyncpa [#allocation3], 1
    %421 = vsyncpa [#allocation4], 1

</llo_original>
